<compile_context>
chip_gen: v5e
topology: v5e:2x2
jax: 0.10.0
libtpu: 0.0.40
codegen_flags: <defaults>
</compile_context>

<pallas_src>
import functools

import jax
import jax.numpy as jnp
from jax.experimental import pallas as pl
from jax.experimental.pallas import tpu as pltpu

NEURONS = 12
IN_FEATURES = 8
OUT_FEATURES = 1


def _mlp_kernel(xT_ref, w1_ref, w2_ref, b2_ref, w3t_ref, b3_ref, o_ref):
    # xT_ref: (8, TILE_B) — batch on lanes.
    # w1: (12, 8), w2: (12, 12), b2: (12, 1), w3t: (12, 1), b3: (1, 1)
    xT = xT_ref[...]

    # Layer 1: Linear (no bias) + ReLU  -> (12, TILE_B)   [MXU]
    h1 = jnp.dot(w1_ref[...], xT, preferred_element_type=jnp.float32)
    h1 = jnp.maximum(h1, 0.0)

    # Layer 2: Linear (+ bias broadcast along lanes) + ReLU -> (12, TILE_B) [MXU]
    h2 = jnp.dot(w2_ref[...], h1, preferred_element_type=jnp.float32) + b2_ref[...]
    h2 = jnp.maximum(h2, 0.0)

    # Output layer: single row -> keep it off the MXU.  Broadcast-mul (VPU) +
    # sublane reduce (XLU), both of which have slack in this kernel.
    out = jnp.sum(w3t_ref[...] * h2, axis=0, keepdims=True) + b3_ref[...]
    o_ref[...] = out.astype(o_ref.dtype)  # (1, TILE_B) lane-dense store


def _round_up(n, m):
    return ((n + m - 1) // m) * m


@functools.partial(jax.jit, static_argnames=("tile_b",))
def salary_predictor_forward(x, params, *, tile_b=32768):
    """x: (B, 8) float32 (PyTorch row-major input).  Returns (B, 1) float32.

    params hold torch-layout weights: w1 (12,8), w2 (12,12), b2 (12,1),
    w3 (1,12), b3 (1,1).
    """
    w1, w2, b2, w3, b3 = (params["w1"], params["w2"], params["b2"],
                          params["w3"], params["b3"])
    B = x.shape[0]

    # Clamp the batch tile:
    #  * never larger than the 128-rounded batch (no huge pad for tiny B),
    #  * at most ceil(B/2) rounded to 128 so large batches give >=2 grid
    #    steps (v7x megacore sharding via "parallel" semantics).
    tile_b = max(128, min(tile_b,
                          _round_up(pl.cdiv(B, 2), 128),
                          _round_up(B, 128)))
    assert tile_b % 128 == 0
    num_tiles = pl.cdiv(B, tile_b)
    b_pad = num_tiles * tile_b

    # Pad + transpose stay inside this jit -> fused with the kernel's consumer
    # copy; skip the pad entirely when the batch is already tile-aligned.
    xf = x.astype(jnp.float32)
    if b_pad != B:
        xf = jnp.pad(xf, ((0, b_pad - B), (0, 0)))
    xT = xf.T                      # (8, B_pad), batch on lanes
    w3t = w3.T                     # (12, 1), pre-transposed for the VPU layer

    full = lambda a: pl.BlockSpec(a.shape, lambda i: (0, 0))  # VMEM-resident

    cost = pl.CostEstimate(
        flops=540 * b_pad,          # ~540 flops per (padded) sample
        transcendentals=0,
        bytes_accessed=36 * b_pad,  # 32 B in + 4 B out per sample (weights ~0)
    )

    out_T = pl.pallas_call(
        _mlp_kernel,
        out_shape=jax.ShapeDtypeStruct((OUT_FEATURES, b_pad), jnp.float32),
        grid=(num_tiles,),
        in_specs=[
            pl.BlockSpec((IN_FEATURES, tile_b), lambda i: (0, i)),
            full(w1), full(w2), full(b2), full(w3t), full(b3),
        ],
        out_specs=pl.BlockSpec((OUT_FEATURES, tile_b), lambda i: (0, i)),
        compiler_params=pltpu.CompilerParams(
            dimension_semantics=("parallel",),
            vmem_limit_bytes=32 * 1024 * 1024,
        ),
        cost_estimate=cost,
    )(xT, w1, w2, b2, w3t, b3)

    # Back to PyTorch output layout (B, 1), dropping batch padding (fused here).
    return out_T[:, :B].T


def init_params(key):
    """Deterministic init mimicking torch.nn.Linear defaults
    (uniform in [-1/sqrt(fan_in), 1/sqrt(fan_in)]); torch (out, in) layout."""
    k1, k2, k3, k4, k5 = jax.random.split(key, 5)

    def u(k, shape, fan_in):
        bound = 1.0 / jnp.sqrt(fan_in)
        return jax.random.uniform(k, shape, jnp.float32, -bound, bound)

    return {
        # layer1: Linear(8 -> 12, bias=False)
        "w1": u(k1, (NEURONS, IN_FEATURES), IN_FEATURES),
        # layer2: Linear(12 -> 12)
        "w2": u(k2, (NEURONS, NEURONS), NEURONS),
        "b2": u(k3, (NEURONS, 1), NEURONS),
        # out: Linear(12 -> 1)
        "w3": u(k4, (OUT_FEATURES, NEURONS), NEURONS),
        "b3": u(k5, (OUT_FEATURES, 1), NEURONS),
    }


if __name__ == "__main__":
    key = jax.random.PRNGKey(0)
    pkey, xkey = jax.random.split(key)
    params = init_params(pkey)

    batch = 8
    x = jax.random.normal(xkey, (batch, IN_FEATURES), jnp.float32)

    out = salary_predictor_forward(x, params)
    jax.block_until_ready(out)

    # Pure-JAX reference of the same forward pass (torch Linear: y = x @ W.T + b).
    # Tolerance is loose-ish because the MXU's default dot precision rounds f32
    # operands to bf16, while the kernel's final layer is exact f32 on the VPU.
    ref = jnp.maximum(x @ params["w1"].T, 0.0)
    ref = jnp.maximum(ref @ params["w2"].T + params["b2"].T, 0.0)
    ref = ref @ params["w3"].T + params["b3"].T
    assert out.shape == (batch, OUT_FEATURES)
    assert jnp.allclose(out, ref, atol=2e-2, rtol=2e-2), "mismatch vs reference"

    print("KERNEL_OK")
</pallas_src>

<mosaic_0001>
module attributes {stable_mosaic.version = 11 : i64} {
  func.func @_mlp_kernel(%arg0: i32, %arg1: memref<8x128xf32, #tpu.memory_space<vmem>>, %arg2: memref<12x8xf32, #tpu.memory_space<vmem>>, %arg3: memref<12x12xf32, #tpu.memory_space<vmem>>, %arg4: memref<12x1xf32, #tpu.memory_space<vmem>>, %arg5: memref<12x1xf32, #tpu.memory_space<vmem>>, %arg6: memref<1x1xf32, #tpu.memory_space<vmem>>, %arg7: memref<1x128xf32, #tpu.memory_space<vmem>>) attributes {dimension_semantics = [#tpu.dimension_semantics<parallel>], iteration_bounds = array<i64: 1>, scalar_prefetch = 0 : i64, scratch_operands = 0 : i64, tpu.core_type = #tpu.core_type<tc>, window_params = [{transform_indices = @transform_0, window_bounds = array<i64: 8, 128>}, {pipeline_mode = #tpu.pipeline_mode<synchronous>, transform_indices = @transform_1, window_bounds = array<i64: 12, 8>}, {pipeline_mode = #tpu.pipeline_mode<synchronous>, transform_indices = @transform_2, window_bounds = array<i64: 12, 12>}, {pipeline_mode = #tpu.pipeline_mode<synchronous>, transform_indices = @transform_3, window_bounds = array<i64: 12, 1>}, {pipeline_mode = #tpu.pipeline_mode<synchronous>, transform_indices = @transform_4, window_bounds = array<i64: 12, 1>}, {pipeline_mode = #tpu.pipeline_mode<synchronous>, transform_indices = @transform_5, window_bounds = array<i64: 1, 1>}, {transform_indices = @transform_6, window_bounds = array<i64: 1, 128>}]} {
    %c0 = arith.constant 0 : index
    %c0_0 = arith.constant 0 : index
    %0 = vector.load %arg1[%c0, %c0_0] : memref<8x128xf32, #tpu.memory_space<vmem>>, vector<8x128xf32>
    %c0_1 = arith.constant 0 : index
    %c0_2 = arith.constant 0 : index
    %1 = vector.load %arg2[%c0_1, %c0_2] : memref<12x8xf32, #tpu.memory_space<vmem>>, vector<12x8xf32>
    %cst = arith.constant dense<0.000000e+00> : vector<12x128xf32>
    %2 = tpu.matmul %1, %0, %cst {dimension_numbers = #tpu.dot_dimension_numbers<[1], [0], [0], [1], [0, 0, 1, 1], [], []>} : vector<12x8xf32>, vector<8x128xf32>, vector<12x128xf32> -> vector<12x128xf32>
    %cst_3 = arith.constant 0.000000e+00 : f32
    %3 = vector.broadcast %cst_3 : f32 to vector<12x128xf32>
    %4 = arith.maximumf %2, %3 : vector<12x128xf32>
    %c0_4 = arith.constant 0 : index
    %c0_5 = arith.constant 0 : index
    %5 = vector.load %arg3[%c0_4, %c0_5] : memref<12x12xf32, #tpu.memory_space<vmem>>, vector<12x12xf32>
    %cst_6 = arith.constant dense<0.000000e+00> : vector<12x128xf32>
    %6 = tpu.matmul %5, %4, %cst_6 {dimension_numbers = #tpu.dot_dimension_numbers<[1], [0], [0], [1], [0, 0, 1, 1], [], []>} : vector<12x12xf32>, vector<12x128xf32>, vector<12x128xf32> -> vector<12x128xf32>
    %c0_7 = arith.constant 0 : index
    %c0_8 = arith.constant 0 : index
    %7 = vector.load %arg4[%c0_7, %c0_8] : memref<12x1xf32, #tpu.memory_space<vmem>>, vector<12x1xf32>
    %8 = vector.broadcast %7 : vector<12x1xf32> to vector<12x128xf32>
    %9 = arith.addf %6, %8 : vector<12x128xf32>
    %cst_9 = arith.constant 0.000000e+00 : f32
    %10 = vector.broadcast %cst_9 : f32 to vector<12x128xf32>
    %11 = arith.maximumf %9, %10 : vector<12x128xf32>
    %c0_10 = arith.constant 0 : index
    %c0_11 = arith.constant 0 : index
    %12 = vector.load %arg5[%c0_10, %c0_11] : memref<12x1xf32, #tpu.memory_space<vmem>>, vector<12x1xf32>
    %13 = vector.broadcast %12 : vector<12x1xf32> to vector<12x128xf32>
    %14 = arith.mulf %13, %11 : vector<12x128xf32>
    %cst_12 = arith.constant dense<0.000000e+00> : vector<128xf32>
    %15 = vector.multi_reduction <add>, %14, %cst_12 [0] : vector<12x128xf32> to vector<128xf32>
    %16 = vector.shape_cast %15 : vector<128xf32> to vector<1x128xf32>
    %c0_13 = arith.constant 0 : index
    %c0_14 = arith.constant 0 : index
    %17 = vector.load %arg6[%c0_13, %c0_14] : memref<1x1xf32, #tpu.memory_space<vmem>>, vector<1x1xf32>
    %18 = vector.broadcast %17 : vector<1x1xf32> to vector<1x128xf32>
    %19 = arith.addf %16, %18 : vector<1x128xf32>
    %c0_15 = arith.constant 0 : index
    %c0_16 = arith.constant 0 : index
    %20 = vector.load %arg7[%c0_15, %c0_16] : memref<1x128xf32, #tpu.memory_space<vmem>>, vector<1x128xf32>
    tpu.vector_store %arg7[%c0_15, %c0_16], %19 {strides = array<i32>} : memref<1x128xf32, #tpu.memory_space<vmem>>, vector<1x128xf32>,
    return
  }
  func.func @transform_0(%arg0: i32) -> (i32, i32) {
    %c0_i32 = arith.constant 0 : i32
    %c0_i32_0 = arith.constant 0 : i32
    return %c0_i32, %arg0 : i32, i32
  }
  func.func @transform_1(%arg0: i32) -> (i32, i32) {
    %c0_i32 = arith.constant 0 : i32
    %c0_i32_0 = arith.constant 0 : i32
    %c0_i32_1 = arith.constant 0 : i32
    return %c0_i32, %c0_i32_0 : i32, i32
  }
  func.func @transform_2(%arg0: i32) -> (i32, i32) {
    %c0_i32 = arith.constant 0 : i32
    %c0_i32_0 = arith.constant 0 : i32
    %c0_i32_1 = arith.constant 0 : i32
    return %c0_i32, %c0_i32_0 : i32, i32
  }
  func.func @transform_3(%arg0: i32) -> (i32, i32) {
    %c0_i32 = arith.constant 0 : i32
    %c0_i32_0 = arith.constant 0 : i32
    %c0_i32_1 = arith.constant 0 : i32
    return %c0_i32, %c0_i32_0 : i32, i32
  }
  func.func @transform_4(%arg0: i32) -> (i32, i32) {
    %c0_i32 = arith.constant 0 : i32
    %c0_i32_0 = arith.constant 0 : i32
    %c0_i32_1 = arith.constant 0 : i32
    return %c0_i32, %c0_i32_0 : i32, i32
  }
  func.func @transform_5(%arg0: i32) -> (i32, i32) {
    %c0_i32 = arith.constant 0 : i32
    %c0_i32_0 = arith.constant 0 : i32
    %c0_i32_1 = arith.constant 0 : i32
    return %c0_i32, %c0_i32_0 : i32, i32
  }
  func.func @transform_6(%arg0: i32) -> (i32, i32) {
    %c0_i32 = arith.constant 0 : i32
    %c0_i32_0 = arith.constant 0 : i32
    return %c0_i32, %arg0 : i32, i32
  }
}

</mosaic_0001>

<llo_original>
// kernel: salary_predictor_forward.1
$region0: #{salary_predictor_forward.1}
  #allocation0 [shape = 'u32[]', space=smem, size = 0x4, offset = 0x4, fixed_abs, tag = 'smem constant byte address 0x4 - core index']
  #allocation1 [shape = 'u32[72,128]{1,0:T(1,128)}', space=vmem, size = 0x9000, scoped, tag = 'internal scratch']
  #allocation2 [shape = 'f32[1,1]{1,0:T(1,128)S(1)}', space=vmem, size = 0x200, scoped, tag = 'scoped memory for salary_predictor_forward.1']
  %s0 = inlined_call_operand.vmem [shape: f32[8,128], index: 0, kind: input, shape index: {}]
  %s1 = inlined_call_operand.vmem [shape: f32[12,8], index: 1, kind: input, shape index: {}]
  %s2 = inlined_call_operand.vmem [shape: f32[12,12], index: 2, kind: input, shape index: {}]
  %s3 = inlined_call_operand.vmem [shape: f32[12,1], index: 3, kind: input, shape index: {}]
  %s4 = inlined_call_operand.vmem [shape: f32[12,1], index: 4, kind: input, shape index: {}]
  %s5 = inlined_call_operand.<no memory space> [shape: f32[1,1], index: 5, kind: input, shape index: {}]
  %s6 = inlined_call_operand.vmem [shape: f32[1,128], index: 6, kind: output, shape index: {}]
  %s7 = sld [smem:[#allocation0]]
  $region34: #{salary_predictor_forward.1} parent=0
    _
  %s9 = ssub.s32 1, %s7
  %s10 = scalar_select 0, %s9, %s7
  %v11 = vstv %s5
  %12 = vst [vmem:[#allocation2] sm:$0x1] %v11
  // Predicated region
  $region2: #{salary_predictor_forward.1} parent=0 // pred_check
    _
  $region3: #{salary_predictor_forward.1} parent=0 // pred_check_branch
    %14 = sbr.rel (0) target = $region5
  $region4: #{salary_predictor_forward.1} parent=0 // pred_region
    _
  $region5: #{salary_predictor_forward.1} parent=0 // pred_fallthru
    _
  // Predicated region
  $region6: #{salary_predictor_forward.1} parent=0 // pred_check
    _
  $region7: #{salary_predictor_forward.1} parent=0 // pred_check_branch
    %16 = sbr.rel (0) target = $region9
  $region8: #{salary_predictor_forward.1} parent=0 // pred_region
    _
  $region9: #{salary_predictor_forward.1} parent=0 // pred_fallthru
    _
  // Predicated region
  $region10: #{salary_predictor_forward.1} parent=0 // pred_check
    _
  $region11: #{salary_predictor_forward.1} parent=0 // pred_check_branch
    %18 = sbr.rel (0) target = $region13
  $region12: #{salary_predictor_forward.1} parent=0 // pred_region
    _
  $region13: #{salary_predictor_forward.1} parent=0 // pred_fallthru
    _
  // Predicated region
  $region14: #{salary_predictor_forward.1} parent=0 // pred_check
    _
  $region15: #{salary_predictor_forward.1} parent=0 // pred_check_branch
    %20 = sbr.rel (0) target = $region17
  $region16: #{salary_predictor_forward.1} parent=0 // pred_region
    _
  $region17: #{salary_predictor_forward.1} parent=0 // pred_fallthru
    _
  // Predicated region
  $region18: #{salary_predictor_forward.1} parent=0 // pred_check
    _
  $region19: #{salary_predictor_forward.1} parent=0 // pred_check_branch
    %22 = sbr.rel (0) target = $region21
  $region20: #{salary_predictor_forward.1} parent=0 // pred_region
    _
  $region21: #{salary_predictor_forward.1} parent=0 // pred_fallthru
    _
  // Predicated region
  $region22: #{salary_predictor_forward.1} parent=0 // pred_check
    _
  $region23: #{salary_predictor_forward.1} parent=0 // pred_check_branch
    %24 = sbr.rel (0) target = $region25
  $region24: #{salary_predictor_forward.1} parent=0 // pred_region
    _
  $region25: #{salary_predictor_forward.1} parent=0 // pred_fallthru
    _
  %v25 = vld [vmem:[%s0] sm:$0xff]
  %v26 = vld [vmem:[%s1] sm:$0xff]
  %v27 = vld [vmem:[%s1 + $0x8] sm:$0xf]
  %vm28 = vcmask 64512
  %v30 = vsel %vm28, %v26, 0
  %v33 = vsel %vm28, %v27, 0
  %35 = vmatpush.msra.mxu0 0.0
  %36 = vmatpush.msra.mxu0 0.0
  %37 = vmatpush.msra.mxu0 0.0
  %38 = vmatpush.msra.mxu0 0.0
  %39 = vmatpush.msra.mxu0 0.0
  %40 = vmatpush.msra.mxu0 0.0
  %41 = vmatpush.msra.mxu0 0.0
  %42 = vmatpush.msra.mxu0 0.0
  %43 = vmatpush.msra.mxu0 0.0
  %44 = vmatpush.msra.mxu0 0.0
  %45 = vmatpush.msra.mxu0 0.0
  %46 = vmatpush.msra.mxu0 0.0
  %47 = vmatpush.msra.mxu0 0.0
  %48 = vmatpush.msra.mxu0 0.0
  %49 = vmatpush.msra.mxu0 0.0
  %50 = vmatpush.msra.mxu0 %v25
  %51 = vmatmul.f32.gmra.mxu0 %v30
  %v52 = vpop.f32.mrf.mxu0
  %v53 = vadd.f32 0.0, %v52
  %54 = vmatmul.f32.gmra.mxu0 %v33
  %v55 = vpop.f32.mrf.mxu0
  %v56 = vadd.f32 0.0, %v55
  %57 = vdwg.mxu0
  %v58 = vmax.f32 %v53, 0.0
  %v59 = vmax.f32 %v56, 0.0
  %v60 = vld [vmem:[%s2] sm:$0xff]
  %v61 = vld [vmem:[%s2 + $0x8] sm:$0xf]
  %v62 = vld [vmem:[%s3] sm:$0xff]
  %v63 = vld [vmem:[%s3 + $0x8] sm:$0xf]
  %65 = vset.pattern.permute.xlu0 0
  %66 = vperm.xlu0 %65, %v62
  %v67 = vpop.permute.xlu0 %66
  %70 = vset.pattern.permute.xlu0 0
  %71 = vperm.xlu0 %70, %v63
  %v72 = vpop.permute.xlu0 %71
  %vm74 = vcmask 97280
  %v76 = vsel %vm74, %v60, 0
  %v79 = vsel %vm74, %v61, 0
  %vm81 = vcmask 1043456
  %v83 = vsel %vm81, %v59, 0
  %85 = vmatpush.msra.mxu0 0.0
  %86 = vmatpush.msra.mxu0 0.0
  %87 = vmatpush.msra.mxu0 0.0
  %88 = vmatpush.msra.mxu0 0.0
  %89 = vmatpush.msra.mxu0 0.0
  %90 = vmatpush.msra.mxu0 0.0
  %91 = vmatpush.msra.mxu0 0.0
  %92 = vmatpush.msra.mxu0 0.0
  %93 = vmatpush.msra.mxu0 0.0
  %94 = vmatpush.msra.mxu0 0.0
  %95 = vmatpush.msra.mxu0 0.0
  %96 = vmatpush.msra.mxu0 0.0
  %97 = vmatpush.msra.mxu0 0.0
  %98 = vmatpush.msra.mxu0 0.0
  %99 = vmatpush.msra.mxu0 %v83
  %100 = vmatpush.msra.mxu0 %v58
  %101 = vmatmul.f32.gmra.mxu0 %v76
  %v102 = vpop.f32.mrf.mxu0
  %v103 = vadd.f32 %v67, %v102
  %104 = vmatmul.f32.gmra.mxu0 %v79
  %v105 = vpop.f32.mrf.mxu0
  %v106 = vadd.f32 %v72, %v105
  %107 = vdwg.mxu0
  %v108 = vmax.f32 %v103, 0.0
  %v109 = vmax.f32 %v106, 0.0
  %v110 = vld [vmem:[%s4] sm:$0xff]
  %v111 = vld [vmem:[%s4 + $0x8] sm:$0xf]
  %113 = vset.pattern.permute.xlu0 0
  %114 = vperm.xlu0 %113, %v110
  %v115 = vpop.permute.xlu0 %114
  %118 = vset.pattern.permute.xlu0 0
  %119 = vperm.xlu0 %118, %v111
  %v120 = vpop.permute.xlu0 %119
  %v122 = vmul.f32 %v115, %v108
  %v123 = vmul.f32 %v120, %v109
  %v124 = vsel %vm81, %v123, 0.0
  %v125 = vadd.f32 %v122, %v124
  %v126 = vrot.slane %v125, 4
  %v127 = vadd.f32 %v125, %v126
  %v128 = vrot.slane %v127, 2
  %v129 = vadd.f32 %v127, %v128
  %v130 = vrot.slane %v129, 1
  %v131 = vadd.f32 %v129, %v130
  %v132 = vld [vmem:[#allocation2] sm:$0x1]
  %134 = vset.pattern.permute.xlu0 0
  %135 = vperm.xlu0 %134, %v132
  %v136 = vpop.permute.xlu0 %135
  %v138 = vperm.slane %v136, 0
  %v139 = vadd.f32 %v131, %v138
  %140 = vst [vmem:[%s6] sm:$0x1] %v139
  // Predicated region
  $region26: #{salary_predictor_forward.1} parent=0 // pred_check
    _
  $region27: #{salary_predictor_forward.1} parent=0 // pred_check_branch
    %142 = sbr.rel (0) target = $region29
  $region28: #{salary_predictor_forward.1} parent=0 // pred_region
    _
  $region29: #{salary_predictor_forward.1} parent=0 // pred_fallthru
    _
  // Predicated region
  $region30: #{salary_predictor_forward.1} parent=0 // pred_check
    _
  $region31: #{salary_predictor_forward.1} parent=0 // pred_check_branch
    %144 = sbr.rel (0) target = $region33
  $region32: #{salary_predictor_forward.1} parent=0 // pred_region
    _
  $region33: #{salary_predictor_forward.1} parent=0 // pred_fallthru
    _

</llo_original>
